<compile_context>
chip_gen: v7x
topology: tpu7x:2x2x1
jax: 0.10.0
libtpu: 0.0.40
codegen_flags: <defaults>
</compile_context>

<pallas_src>
import math
import functools

import numpy as np
import jax
import jax.numpy as jnp
from jax import lax
from jax.experimental import pallas as pl
from jax.experimental.pallas import tpu as pltpu

NUM_TECH = 6      # mix, falsetto, breathe, bubble, strong, weak
NUM_CLASSES = 3   # embedding vocab size
SLOT = NUM_TECH * NUM_CLASSES       # 18 one-hot columns per token
SUB_ROWS = 512                      # in-kernel compute chunk (rows)
PIPE_BUDGET = 16 * 1024 * 1024      # double-buffered idx+out blocks budget


def _round_up(x, m):
    return ((x + m - 1) // m) * m


def _tech_encoder_kernel(idx_ref, consts_ref, tab_ref, o_ref, *, pack, gp, sub):
    # idx_ref   : (tile_r, pack) int32  -- one packed int (6 x 2-bit) per token
    # consts_ref: (2, 18) int32         -- row 0: bit masks, row 1: targets
    # tab_ref   : (18*gp, gp*H) f32     -- prescaled block-diagonal table
    # o_ref     : (tile_r, pack*H) f32  -- pack tokens per lane-dense row
    mask = consts_ref[0:1, :]                    # (1, 18)
    tgt = consts_ref[1:2, :]                     # (1, 18)
    tab = tab_ref[...]                           # (18*gp, gp*H), tiny, hoisted
    gw = tab.shape[1]                            # gp * hidden
    ng = pack // gp                              # matmul groups per output row
    tile_r = o_ref.shape[0]
    n_full = tile_r // sub
    rem = tile_r - n_full * sub                  # static remainder (mult of 8)

    def do_chunk(r0, m):
        idx = idx_ref[pl.ds(r0, m), :]           # (m, pack) -- per-chunk load
        for g in range(ng):                      # static (ng <= 4)
            cols = []
            for q in range(gp):                  # static (gp <= 4)
                col = idx[:, g * gp + q:g * gp + q + 1]        # (m, 1)
                cols.append(((col & mask) == tgt).astype(jnp.float32))
            oh = cols[0] if gp == 1 else jnp.concatenate(cols, axis=1)
            # gather-as-matmul; table already carries the sqrt(H) scale
            o_ref[pl.ds(r0, m), pl.ds(g * gw, gw)] = jnp.dot(
                oh, tab, preferred_element_type=jnp.float32)

    def body(i, carry):
        do_chunk(pl.multiple_of(i * sub, sub), sub)
        return carry

    lax.fori_loop(0, n_full, body, 0)
    if rem:                                      # static tail chunk
        do_chunk(n_full * sub, rem)


def tech_encoder_forward(mix, falsetto, breathe, bubble, strong, weak, tables):
    """tables: (6, 3, H) float32; index args: (B, T) ints. Returns (B, T, H)."""
    hidden = tables.shape[-1]
    B, T = mix.shape
    n = B * T

    # ---- token packing: P tokens per lane-dense output row ------------------
    if hidden < 128 and 128 % hidden == 0:
        pack = 128 // hidden
    else:
        pack = 1
    gp = min(pack, 4)              # slots per matmul group (caps MXU waste)
    ng = pack // gp
    width = pack * hidden
    gw = gp * hidden

    # ---- prescaled (block-diagonal within a group) RHS table ----------------
    scale = jnp.float32(math.sqrt(hidden))
    flat = tables.reshape(SLOT, hidden).astype(jnp.float32) * scale
    if gp > 1:
        rhs = jnp.zeros((SLOT * gp, gw), jnp.float32)
        for p in range(gp):
            rhs = rhs.at[p * SLOT:(p + 1) * SLOT,
                         p * hidden:(p + 1) * hidden].set(flat)
    else:
        rhs = flat

    # ---- pack 6 x 2-bit technique flags into one int32 per token ------------
    # `& 3` keeps a bad flag from corrupting a neighbor's 2-bit field.
    # TODO(synk): if this layer is called repeatedly with the same flags,
    # cache `packed` across calls to avoid the repacking pre-pass.
    streams = [mix, falsetto, breathe, bubble, strong, weak]
    packed = jnp.zeros((n,), jnp.int32)
    for k, s in enumerate(streams):
        packed = packed | ((s.reshape(n).astype(jnp.int32) & 3) << (2 * k))

    # one-hot column j (= 3*k + c): bit-mask / target constants
    mask_np = np.array([3 << (2 * (j // 3)) for j in range(SLOT)], np.int32)
    tgt_np = np.array([(j % 3) << (2 * (j // 3)) for j in range(SLOT)], np.int32)
    consts = jnp.asarray(np.stack([mask_np, tgt_np], axis=0))    # (2, 18)

    # ---- tiling --------------------------------------------------------------
    # VMEM per step (double-buffered): idx block is lane-padded to 128 lanes,
    # out block is `width` lanes.  Keep both inside PIPE_BUDGET.
    rows = pl.cdiv(n, pack)
    per_row = 4 * (2 * 128 + 2 * width)
    tile_cap = max(SUB_ROWS, (PIPE_BUDGET // per_row) // 8 * 8)
    steps = max(1, pl.cdiv(rows, tile_cap))
    if steps > 1 and steps % 2 == 1:
        steps += 1                 # even step count -> balanced v7x megacore
    tile_r = max(8, _round_up(pl.cdiv(rows, steps), 8))
    rows_pad = _round_up(rows, tile_r)
    grid = (rows_pad // tile_r,)
    sub = min(SUB_ROWS, tile_r)

    pad_tokens = rows_pad * pack - n
    if pad_tokens:
        pad_val = sum(2 << (2 * k) for k in range(NUM_TECH))  # padding_idx=2
        packed = jnp.concatenate(
            [packed, jnp.full((pad_tokens,), pad_val, jnp.int32)])
    idx2d = packed.reshape(rows_pad, pack)

    # explicit VMEM limit: pipeline buffers + small in-kernel scratch + slack
    scratch_est = 10 * sub * max(128, width) * 4
    vmem_est = per_row * tile_r + 2 * rhs.size * 4 + 2 * 8 * 128 * 4 + scratch_est
    vmem_limit = int(min(max(8 << 20, vmem_est + (2 << 20)), 56 << 20))

    cost = pl.CostEstimate(
        flops=2 * rows_pad * ng * (SLOT * gp) * gw,
        transcendentals=0,
        bytes_accessed=4 * (rows_pad * pack + rows_pad * width
                            + rhs.size + 2 * SLOT),
    )

    out = pl.pallas_call(
        functools.partial(_tech_encoder_kernel, pack=pack, gp=gp, sub=sub),
        out_shape=jax.ShapeDtypeStruct((rows_pad, width), jnp.float32),
        grid_spec=pltpu.PrefetchScalarGridSpec(
            num_scalar_prefetch=0,
            grid=grid,
            in_specs=[
                pl.BlockSpec((tile_r, pack), lambda i: (i, 0)),
                pl.BlockSpec((2, SLOT), lambda i: (0, 0)),
                pl.BlockSpec(rhs.shape, lambda i: (0, 0)),
            ],
            out_specs=pl.BlockSpec((tile_r, width), lambda i: (i, 0)),
        ),
        compiler_params=pltpu.CompilerParams(
            dimension_semantics=("parallel",),
            vmem_limit_bytes=vmem_limit),
        cost_estimate=cost,
    )(idx2d, consts, rhs)

    return out.reshape(rows_pad * pack, hidden)[:n].reshape(B, T, hidden)


def init_tables(key, hidden):
    # matches nn.init.normal_(weight, 0.0, hidden ** -0.5) applied to all rows
    std = hidden ** (-0.5)
    return jax.random.normal(key, (NUM_TECH, NUM_CLASSES, hidden),
                             dtype=jnp.float32) * std


def _reference(mix, falsetto, breathe, bubble, strong, weak, tables):
    hidden = tables.shape[-1]
    scale = math.sqrt(hidden)
    streams = [mix, falsetto, breathe, bubble, strong, weak]
    return sum(tables[k][streams[k]] * scale for k in range(NUM_TECH))


if __name__ == "__main__":
    hidden_channels = 32
    B, T = 2, 8

    key = jax.random.PRNGKey(0)
    k_tab, k_mix, k_fal, k_bre, k_bub, k_str, k_wk = jax.random.split(key, 7)

    tables = init_tables(k_tab, hidden_channels)

    def rand_idx(k):
        return jax.random.randint(k, (B, T), 0, NUM_CLASSES, dtype=jnp.int32)

    mix = rand_idx(k_mix)
    falsetto = rand_idx(k_fal)
    breathe = rand_idx(k_bre)
    bubble = rand_idx(k_bub)
    strong = rand_idx(k_str)
    weak = rand_idx(k_wk)

    out = tech_encoder_forward(mix, falsetto, breathe, bubble, strong, weak, tables)
    out = jax.block_until_ready(out)

    ref = _reference(mix, falsetto, breathe, bubble, strong, weak, tables)
    assert out.shape == (B, T, hidden_channels)
    assert jnp.allclose(out, ref, atol=1e-4, rtol=1e-5)

    print("KERNEL_OK")
</pallas_src>

<mosaic_0001>
module attributes {stable_mosaic.version = 11 : i64} {
  func.func @_tech_encoder_kernel(%arg0: i32, %arg1: memref<8x4xi32, #tpu.memory_space<vmem>>, %arg2: memref<2x18xi32, #tpu.memory_space<vmem>>, %arg3: memref<72x128xf32, #tpu.memory_space<vmem>>, %arg4: memref<8x128xf32, #tpu.memory_space<vmem>>) attributes {dimension_semantics = [#tpu.dimension_semantics<parallel>], iteration_bounds = array<i64: 1>, scalar_prefetch = 0 : i64, scratch_operands = 0 : i64, tpu.core_type = #tpu.core_type<tc>, window_params = [{transform_indices = @transform_0, window_bounds = array<i64: 8, 4>}, {pipeline_mode = #tpu.pipeline_mode<synchronous>, transform_indices = @transform_1, window_bounds = array<i64: 2, 18>}, {pipeline_mode = #tpu.pipeline_mode<synchronous>, transform_indices = @transform_2, window_bounds = array<i64: 72, 128>}, {transform_indices = @transform_3, window_bounds = array<i64: 8, 128>}]} {
    %c0 = arith.constant 0 : index
    %c0_0 = arith.constant 0 : index
    %0 = vector.load %arg2[%c0, %c0_0] : memref<2x18xi32, #tpu.memory_space<vmem>>, vector<1x18xi32>
    %c1 = arith.constant 1 : index
    %c0_1 = arith.constant 0 : index
    %1 = vector.load %arg2[%c1, %c0_1] : memref<2x18xi32, #tpu.memory_space<vmem>>, vector<1x18xi32>
    %c0_2 = arith.constant 0 : index
    %c0_3 = arith.constant 0 : index
    %2 = vector.load %arg3[%c0_2, %c0_3] : memref<72x128xf32, #tpu.memory_space<vmem>>, vector<72x128xf32>
    %c0_i32 = arith.constant 0 : i32
    %c8_i32 = arith.constant 8 : i32
    %3 = arith.muli %c0_i32, %c8_i32 : i32
    %4 = tpu.assume_multiple %3, 8 : i32
    %5 = arith.index_cast %4 : i32 to index
    %c0_4 = arith.constant 0 : index
    %6 = vector.load %arg1[%5, %c0_4] : memref<8x4xi32, #tpu.memory_space<vmem>>, vector<8x4xi32>
    %7 = vector.extract_strided_slice %6 {offsets = [0, 0], sizes = [8, 1], strides = [1, 1]} : vector<8x4xi32> to vector<8x1xi32>
    %8 = vector.broadcast %7 : vector<8x1xi32> to vector<8x18xi32>
    %9 = vector.broadcast %0 : vector<1x18xi32> to vector<8x18xi32>
    %10 = arith.andi %8, %9 : vector<8x18xi32>
    %11 = vector.broadcast %1 : vector<1x18xi32> to vector<8x18xi32>
    %12 = arith.cmpi eq, %10, %11 : vector<8x18xi32>
    %13 = arith.extui %12 : vector<8x18xi1> to vector<8x18xi32>
    %14 = arith.sitofp %13 : vector<8x18xi32> to vector<8x18xf32>
    %15 = vector.extract_strided_slice %6 {offsets = [0, 1], sizes = [8, 1], strides = [1, 1]} : vector<8x4xi32> to vector<8x1xi32>
    %16 = vector.broadcast %15 : vector<8x1xi32> to vector<8x18xi32>
    %17 = vector.broadcast %0 : vector<1x18xi32> to vector<8x18xi32>
    %18 = arith.andi %16, %17 : vector<8x18xi32>
    %19 = vector.broadcast %1 : vector<1x18xi32> to vector<8x18xi32>
    %20 = arith.cmpi eq, %18, %19 : vector<8x18xi32>
    %21 = arith.extui %20 : vector<8x18xi1> to vector<8x18xi32>
    %22 = arith.sitofp %21 : vector<8x18xi32> to vector<8x18xf32>
    %23 = vector.extract_strided_slice %6 {offsets = [0, 2], sizes = [8, 1], strides = [1, 1]} : vector<8x4xi32> to vector<8x1xi32>
    %24 = vector.broadcast %23 : vector<8x1xi32> to vector<8x18xi32>
    %25 = vector.broadcast %0 : vector<1x18xi32> to vector<8x18xi32>
    %26 = arith.andi %24, %25 : vector<8x18xi32>
    %27 = vector.broadcast %1 : vector<1x18xi32> to vector<8x18xi32>
    %28 = arith.cmpi eq, %26, %27 : vector<8x18xi32>
    %29 = arith.extui %28 : vector<8x18xi1> to vector<8x18xi32>
    %30 = arith.sitofp %29 : vector<8x18xi32> to vector<8x18xf32>
    %31 = vector.extract_strided_slice %6 {offsets = [0, 3], sizes = [8, 1], strides = [1, 1]} : vector<8x4xi32> to vector<8x1xi32>
    %32 = vector.broadcast %31 : vector<8x1xi32> to vector<8x18xi32>
    %33 = vector.broadcast %0 : vector<1x18xi32> to vector<8x18xi32>
    %34 = arith.andi %32, %33 : vector<8x18xi32>
    %35 = vector.broadcast %1 : vector<1x18xi32> to vector<8x18xi32>
    %36 = arith.cmpi eq, %34, %35 : vector<8x18xi32>
    %37 = arith.extui %36 : vector<8x18xi1> to vector<8x18xi32>
    %38 = arith.sitofp %37 : vector<8x18xi32> to vector<8x18xf32>
    %39 = tpu.concatenate %14, %22, %30, %38 in 1 : vector<8x18xf32>, vector<8x18xf32>, vector<8x18xf32>, vector<8x18xf32> -> vector<8x72xf32>
    %cst = arith.constant dense<0.000000e+00> : vector<8x128xf32>
    %40 = tpu.matmul %39, %2, %cst {dimension_numbers = #tpu.dot_dimension_numbers<[1], [0], [0], [1], [0, 0, 1, 1], [], []>} : vector<8x72xf32>, vector<72x128xf32>, vector<8x128xf32> -> vector<8x128xf32>
    %41 = arith.index_cast %4 : i32 to index
    %c0_5 = arith.constant 0 : index
    %42 = vector.load %arg4[%41, %c0_5] : memref<8x128xf32, #tpu.memory_space<vmem>>, vector<8x128xf32>
    tpu.vector_store %arg4[%41, %c0_5], %40 {strides = array<i32>} : memref<8x128xf32, #tpu.memory_space<vmem>>, vector<8x128xf32>,
    %c1_i32 = arith.constant 1 : i32
    return
  }
  func.func @transform_0(%arg0: i32) -> (i32, i32) {
    %c0_i32 = arith.constant 0 : i32
    %c0_i32_0 = arith.constant 0 : i32
    return %arg0, %c0_i32 : i32, i32
  }
  func.func @transform_1(%arg0: i32) -> (i32, i32) {
    %c0_i32 = arith.constant 0 : i32
    %c0_i32_0 = arith.constant 0 : i32
    %c0_i32_1 = arith.constant 0 : i32
    return %c0_i32, %c0_i32_0 : i32, i32
  }
  func.func @transform_2(%arg0: i32) -> (i32, i32) {
    %c0_i32 = arith.constant 0 : i32
    %c0_i32_0 = arith.constant 0 : i32
    %c0_i32_1 = arith.constant 0 : i32
    return %c0_i32, %c0_i32_0 : i32, i32
  }
  func.func @transform_3(%arg0: i32) -> (i32, i32) {
    %c0_i32 = arith.constant 0 : i32
    %c0_i32_0 = arith.constant 0 : i32
    return %arg0, %c0_i32 : i32, i32
  }
}

</mosaic_0001>

<llo_original>
// kernel: tpu_custom_call.1
$region0: #{tpu_custom_call.1}
  #allocation0 [shape = 'u32[]', space=smem, size = 0x4, offset = 0x4, fixed_abs, tag = 'smem constant byte address 0x4 - core index']
  #allocation1 [shape = 'u32[144,128]{1,0:T(1,128)}', space=vmem, size = 0x12000, scoped, tag = 'internal scratch']
  %s0 = inlined_call_operand.vmem [shape: s32[8,4], index: 0, kind: input, shape index: {}]
  %s1 = inlined_call_operand.vmem [shape: s32[2,18], index: 1, kind: input, shape index: {}]
  %s2 = inlined_call_operand.hbm [shape: f32[72,128], index: 2, kind: input, shape index: {}]
  %s3 = inlined_call_operand.hbm [shape: f32[8,128], index: 3, kind: output, shape index: {}]
  %s4 = sld [smem:[#allocation0]]
  $region26: #{tpu_custom_call.1} parent=0
    _
  %s6 = ssub.s32 1, %s4
  %s7 = scalar_select 0, %s6, %s4
  $region1: #{tpu_custom_call.1} parent=0
    #allocation2 [shape = 'u8[36864]{0}', space=vmem, size = 0x9000, scoped, tag = 'input window, operand 2, single buffered']
    #allocation3 [shape = 's32[1]{0}', space=sflag, size = 0x4, scoped, tag = 'scoped memory for tpu_custom_call.1']
    #allocation4 [shape = 's32[1]{0}', space=sflag, size = 0x4, scoped, tag = 'scoped memory for tpu_custom_call.1']
    #allocation5 [shape = 'u8[4096]{0}', space=vmem, size = 0x1000, scoped, tag = 'output window, operand 0, single buffered']
    %8 = vsyncpa [#allocation3], 0
    %9 = vsyncpa [#allocation4], 0
    // Predicated region
    $region2: #{tpu_custom_call.1} parent=1 // pred_check
      _
    $region3: #{tpu_custom_call.1} parent=1 // pred_check_branch
      %11 = sbr.rel (0) target = $region5
    $region4: #{tpu_custom_call.1} parent=1 // pred_region
      _
    $region5: #{tpu_custom_call.1} parent=1 // pred_fallthru
      _
    // Predicated region
    $region6: #{tpu_custom_call.1} parent=1 // pred_check
      _
    $region7: #{tpu_custom_call.1} parent=1 // pred_check_branch
      %13 = sbr.rel (0) target = $region9
    $region8: #{tpu_custom_call.1} parent=1 // pred_region
      _
    $region9: #{tpu_custom_call.1} parent=1 // pred_fallthru
      _
    // Predicated region
    $region10: #{tpu_custom_call.1} parent=1 // pred_check
      _
    $region11: #{tpu_custom_call.1} parent=1 // pred_check_branch
      %15 = sbr.rel (0) target = $region13
    $region12: #{tpu_custom_call.1} parent=1 // pred_region
      %s17 = ssub.s32 1152, 1152
      %18 = vsyncadd [#allocation3], %s17
      %s19 = sshll.u32 [#allocation2], 4
      %s20 = int_to_ptr.vmem [resolvable:$true] %s19
      %25 = dma.hbm_to_vmem [thread:$0]  %s2, 1152, %s20, [#allocation3], 128, 128, 8
    $region13: #{tpu_custom_call.1} parent=1 // pred_fallthru
      _
    // Predicated region
    $region14: #{tpu_custom_call.1} parent=1 // pred_check
      _
    $region15: #{tpu_custom_call.1} parent=1 // pred_check_branch
      %27 = sbr.rel (0) target = $region17
    $region16: #{tpu_custom_call.1} parent=1 // pred_region
      %28 = dma.done [#allocation3], 1152
    $region17: #{tpu_custom_call.1} parent=1 // pred_fallthru
      _
    %v29 = vld [vmem:[%s1] sm:$0x1]
    %v30 = vld [vmem:[%s1 + $0x1] sm:$0x1]
    %v31 = vld [vmem:[#allocation2] sm:$0xff]
    %v32 = vld [vmem:[#allocation2 + $0x8] sm:$0xff]
    %v33 = vld [vmem:[#allocation2 + $0x10] sm:$0xff]
    %v34 = vld [vmem:[#allocation2 + $0x18] sm:$0xff]
    %v35 = vld [vmem:[#allocation2 + $0x20] sm:$0xff]
    %v36 = vld [vmem:[#allocation2 + $0x28] sm:$0xff]
    %v37 = vld [vmem:[#allocation2 + $0x30] sm:$0xff]
    %v38 = vld [vmem:[#allocation2 + $0x38] sm:$0xff]
    %v39 = vld [vmem:[#allocation2 + $0x40] sm:$0xff]
    %v40 = vld [vmem:[%s0] sm:$0xff]
    %41 = vset.pattern.permute.xlu0 0
    %42 = vperm.xlu0 %41, %v40
    %v43 = vpop.permute.xlu0 %42
    %v44 = vlaneseq
    %v45 = vshrl.u32 %v44, 7
    %v46 = vsub.s32 0, %v45
    %v47 = vrot.slane %v29, %v46
    %v48 = vand.u32 %v43, %v47
    %v49 = vlaneseq
    %v50 = vshrl.u32 %v49, 7
    %v51 = vsub.s32 0, %v50
    %v52 = vrot.slane %v30, %v51
    %vm53 = vcmp.eq.s32.totalorder %v48, %v52
    %v54 = vsel %vm53, 1, 0
    %v55 = vcvt.s32.f32 %v54
    %56 = vset.pattern.permute.xlu0 1
    %57 = vperm.xlu0 %56, %v40
    %v58 = vpop.permute.xlu0 %57
    %v59 = vand.u32 %v58, %v47
    %vm60 = vcmp.eq.s32.totalorder %v59, %v52
    %v61 = vsel %vm60, 1, 0
    %v62 = vcvt.s32.f32 %v61
    %63 = vset.pattern.permute.xlu0 2
    %64 = vperm.xlu0 %63, %v40
    %v65 = vpop.permute.xlu0 %64
    %v66 = vand.u32 %v65, %v47
    %vm67 = vcmp.eq.s32.totalorder %v66, %v52
    %v68 = vsel %vm67, 1, 0
    %v69 = vcvt.s32.f32 %v68
    %70 = vset.pattern.permute.xlu0 3
    %71 = vperm.xlu0 %70, %v40
    %v72 = vpop.permute.xlu0 %71
    %v73 = vand.u32 %v72, %v47
    %vm74 = vcmp.eq.s32.totalorder %v73, %v52
    %v75 = vsel %vm74, 1, 0
    %v76 = vcvt.s32.f32 %v75
    %78 = vrot.lane.b32.xlu0 %v62, 18
    %v79 = vpop.permute.xlu0 %78
    %82 = vrot.lane.b32.xlu0 %v69, 36
    %v83 = vpop.permute.xlu0 %82
    %86 = vrot.lane.b32.xlu0 %v76, 54
    %v87 = vpop.permute.xlu0 %86
    %vm89 = vcmask 146432
    %v90 = vsel %vm89, %v55, %v79
    %vm91 = vcmask 293888
    %v92 = vsel %vm91, %v90, %v83
    %vm93 = vcmask 441344
    %v94 = vsel %vm93, %v92, %v87
    %vm95 = vcmask 588800
    %v97 = vsel %vm95, %v94, 0
    %99 = vmatprep.subr.mxu0 0.0
    %100 = vmatpush1.msra.mxu0 %v31
    %101 = vmatprep.subr.mxu0 0.0
    %102 = vmatpush1.msra.mxu0 %v32
    %103 = vmatprep.subr.mxu0 0.0
    %104 = vmatpush1.msra.mxu0 %v33
    %105 = vmatprep.subr.mxu0 0.0
    %106 = vmatpush1.msra.mxu0 %v34
    %107 = vmatprep.subr.mxu0 0.0
    %108 = vmatpush1.msra.mxu0 %v35
    %109 = vmatprep.subr.mxu0 0.0
    %110 = vmatpush1.msra.mxu0 %v36
    %111 = vmatprep.subr.mxu0 0.0
    %112 = vmatpush1.msra.mxu0 %v37
    %113 = vmatprep.subr.mxu0 0.0
    %114 = vmatpush1.msra.mxu0 %v38
    %115 = vmatprep.subr.mxu0 0.0
    %116 = vmatpush1.msra.mxu0 %v39
    %117 = vmatprep.subr.mxu0 0.0
    %118 = vmatpush1.msra.mxu0 0.0
    %119 = vmatprep.subr.mxu0 0.0
    %120 = vmatpush1.msra.mxu0 0.0
    %121 = vmatprep.subr.mxu0 0.0
    %122 = vmatpush1.msra.mxu0 0.0
    %123 = vmatprep.subr.mxu0 0.0
    %124 = vmatpush1.msra.mxu0 0.0
    %125 = vmatprep.subr.mxu0 0.0
    %126 = vmatpush1.msra.mxu0 0.0
    %127 = vmatprep.subr.mxu0 0.0
    %128 = vmatpush1.msra.mxu0 0.0
    %129 = vmatprep.subr.mxu0 0.0
    %130 = vmatpush1.msra.mxu0 0.0
    %131 = vmatprep.subr.mxu0 0.0
    %132 = vmatpush1.msra.mxu0 0.0
    %133 = vmatprep.subr.mxu0 0.0
    %134 = vmatpush1.msra.mxu0 0.0
    %135 = vmatprep.subr.mxu0 0.0
    %136 = vmatpush1.msra.mxu0 0.0
    %137 = vmatprep.subr.mxu0 0.0
    %138 = vmatpush1.msra.mxu0 0.0
    %139 = vmatprep.subr.mxu0 0.0
    %140 = vmatpush1.msra.mxu0 0.0
    %141 = vmatprep.subr.mxu0 0.0
    %142 = vmatpush1.msra.mxu0 0.0
    %143 = vmatprep.subr.mxu0 0.0
    %144 = vmatpush1.msra.mxu0 0.0
    %145 = vmatprep.subr.mxu0 0.0
    %146 = vmatpush1.msra.mxu0 0.0
    %147 = vmatprep.subr.mxu0 0.0
    %148 = vmatpush1.msra.mxu0 0.0
    %149 = vmatprep.subr.mxu0 0.0
    %150 = vmatpush1.msra.mxu0 0.0
    %151 = vmatprep.subr.mxu0 0.0
    %152 = vmatpush1.msra.mxu0 0.0
    %153 = vmatprep.subr.mxu0 0.0
    %154 = vmatpush1.msra.mxu0 0.0
    %155 = vmatprep.subr.mxu0 0.0
    %156 = vmatpush1.msra.mxu0 0.0
    %157 = vmatprep.subr.mxu0 0.0
    %158 = vmatpush1.msra.mxu0 0.0
    %159 = vmatprep.subr.mxu0 0.0
    %160 = vmatpush1.msra.mxu0 0.0
    %161 = vmatprep.subr.mxu0 0.0
    %162 = vmatpush1.msra.mxu0 0.0
    %163 = vmatprep.mubr.f32.mxu0 0.0
    %164 = vmatmul.mubr.f32.gmra.mrb[0].mxu0 %v97
    %v165 = vpop.f32.mrb[0].mxu0
    %v166 = vadd.f32 0.0, %v165
    %v167 = vpop.f32.mrb[0].mxu0
    %168 = vdwg.mxu0
    %169 = vst [vmem:[#allocation5] sm:$0xff] %v166
    // Predicated region
    $region18: #{tpu_custom_call.1} parent=1 // pred_check
      _
    $region19: #{tpu_custom_call.1} parent=1 // pred_check_branch
      %171 = sbr.rel (0) target = $region21
    $region20: #{tpu_custom_call.1} parent=1 // pred_region
      %s173 = ssub.s32 128, 128
      %174 = vsyncadd [#allocation4], %s173
      %s176 = sshll.u32 [#allocation5], 4
      %s177 = int_to_ptr.vmem [resolvable:$true] %s176
      %179 = dma.vmem_to_hbm [thread:$0]  %s177, 128, %s3, [#allocation4]
    $region21: #{tpu_custom_call.1} parent=1 // pred_fallthru
      _
    // Predicated region
    $region22: #{tpu_custom_call.1} parent=1 // pred_check
      _
    $region23: #{tpu_custom_call.1} parent=1 // pred_check_branch
      %181 = sbr.rel (0) target = $region25
    $region24: #{tpu_custom_call.1} parent=1 // pred_region
      %182 = dma.done [#allocation4], 128
    $region25: #{tpu_custom_call.1} parent=1 // pred_fallthru
      _
    %183 = vsyncpa [#allocation3], 1
    %184 = vsyncpa [#allocation4], 1

</llo_original>
